<compile_context>
chip_gen: v5e
topology: v5e:2x2
jax: 0.10.0
libtpu: 0.0.40
codegen_flags: <defaults>
</compile_context>

<pallas_src>
import functools

import jax
import jax.numpy as jnp
from jax import lax
from jax.experimental import pallas as pl
from jax.experimental.pallas import tpu as pltpu


def _round_up(n, m):
    return ((n + m - 1) // m) * m


def fold_root0(weights, biases, root):
    """Fold root[0] into (W0, b0). Call ONCE at parameter-construction time.

    Contract: the kernel assumes this has been applied -- the p == 0 term is
    emitted as a plain (x @ W0 + b0) with no extra root multiply.
    """
    w = weights.at[0].multiply(root[0][None, :])
    b = biases.at[0].multiply(root[0])
    r = root.at[0].set(jnp.ones_like(root[0]))
    return w, b, r


def _supports_buffered():
    """Feature check for single-buffered (grid-invariant) BlockSpecs."""
    if not hasattr(pl, "Buffered"):
        return False
    try:
        pl.BlockSpec((8, 128), lambda i: (0, 0), pipeline_mode=pl.Buffered(1))
        return True
    except TypeError:
        return False


_HAS_BUFFERED = _supports_buffered()


def power_series_kernel(x_ref, w_ref, b_ref, r_ref, o_ref, *,
                        num_powers, cout, cout_p, compute_dtype, tanh_dtype):
    # x_ref : (TM, Cin)  native dtype     w_ref: (Cin, P*cout_p) compute_dtype
    # b_ref : (1, P*cout_p)  f32          r_ref: (P, 1, cout_p)  f32
    # o_ref : (TM, Cout)  -- true (unpadded) Cout, so no post-kernel slice.
    x = x_ref[...].astype(compute_dtype)          # in-kernel cast, hidden under MXU/DMA
    # One wide, lane-dense MXU push per row tile; f32 accumulation.
    y_all = jnp.dot(x, w_ref[...], preferred_element_type=jnp.float32) + b_ref[...]
    # p == 0 term: root[0] is already folded into W0/b0 (see fold_root0).
    acc = y_all[:, :cout_p]
    for p in range(1, num_powers):                # small static P -> unrolled
        y = y_all[:, p * cout_p:(p + 1) * cout_p]  # 128-aligned static slice
        # tanh_dtype=bf16 halves EUP work on v6e/v7x if transcendentals bind;
        # keep the root-mul and accumulation in f32.
        t = jnp.tanh(lax.integer_pow(y, p).astype(tanh_dtype)).astype(jnp.float32)
        acc = acc + r_ref[p] * t
    o_ref[...] = acc[:, :cout].astype(o_ref.dtype)


def power_series_conv(x2d, weights, biases, root, *, tile_m=512,
                      compute_dtype=jnp.bfloat16, tanh_dtype=jnp.float32):
    """x2d: (M, Cin); weights: (P, Cin, Cout); biases: (P, Cout); root: (P, Cout).

    `weights`/`biases`/`root` must have root[0] already folded in (fold_root0).
    `compute_dtype` is the MXU input dtype -- bf16 is recommended on ALL
    generations (v5e/v6e/v7x MXUs are bf16-native); accumulation and the
    epilogue stay in f32.  `tanh_dtype=jnp.bfloat16` is an optional v6e/v7x
    knob if the EUP (transcendental) slot saturates.
    """
    M, Cin = x2d.shape
    P, _, Cout = weights.shape
    out_dtype = x2d.dtype

    cd = compute_dtype if compute_dtype is not None else x2d.dtype
    td = tanh_dtype if tanh_dtype is not None else jnp.float32

    cout_p = _round_up(Cout, 128)        # lane-dense fused-matmul N dimension

    # Zero-pad ONLY the (tiny, one-off) parameters along the output dim so each
    # power's slice of the fused matmul is 128-lane aligned.  The kernel output
    # itself stays at the true Cout (no output pad, no post-kernel slice copy).
    if cout_p != Cout:
        weights = jnp.pad(weights, ((0, 0), (0, 0), (0, cout_p - Cout)))
        biases = jnp.pad(biases, ((0, 0), (0, cout_p - Cout)))
        root = jnp.pad(root, ((0, 0), (0, cout_p - Cout)))

    # Fuse the P weight matrices along the output dim: (Cin, P*cout_p).
    w_fused = jnp.transpose(weights, (1, 0, 2)).reshape(Cin, P * cout_p).astype(cd)
    b_fused = biases.reshape(1, P * cout_p).astype(jnp.float32)
    r3 = root.reshape(P, 1, cout_p).astype(jnp.float32)

    # ---- generation-aware row tiling / VMEM budget ---------------------------
    x_bytes = jnp.dtype(x2d.dtype).itemsize
    cd_bytes = jnp.dtype(cd).itemsize
    out_bytes = jnp.dtype(out_dtype).itemsize
    nbuf = 1 if _HAS_BUFFERED else 2     # pipeline copies of grid-invariant operands
    param_bytes = nbuf * (Cin * P * cout_p * cd_bytes + 2 * P * cout_p * 4)
    vmem_budget = 48 << 20               # conservative per-TC budget (fits v7x's 64 MiB)

    def tile_bytes(tm):
        return (2 * tm * Cin * x_bytes          # x tile (double-buffered)
                + 2 * tm * Cout * out_bytes     # out tile (double-buffered)
                + tm * P * cout_p * 4           # y_all f32 intermediate
                + tm * cout_p * 4)              # acc f32

    # TODO(synk): if param_bytes alone exceeds the per-TC budget (very large
    # Cin * P * Cout on v7x's 64 MiB VMEM), add a grid axis tiling the fused
    # weights (over cout chunks / Cin) instead of keeping them VMEM-resident.
    tm = _round_up(min(tile_m, _round_up(M, 8)), 8)
    while tm > 8 and param_bytes + tile_bytes(tm) > vmem_budget:
        tm = _round_up(max(tm // 2, 8), 8)

    # Keep >= 2 grid steps whenever possible so the "parallel" axis can shard
    # across v7x's two TensorCores (neutral on single-TC v5e/v6e).
    if pl.cdiv(M, tm) < 2 and M > 8:
        tm = _round_up(pl.cdiv(M, 2), 8)

    grid_m = pl.cdiv(M, tm)              # ragged tail handled by Pallas masking
    vmem_limit = min(max(int((param_bytes + tile_bytes(tm)) * 1.5) + (4 << 20),
                         32 << 20), 100 << 20)

    kernel = functools.partial(
        power_series_kernel, num_powers=P, cout=Cout, cout_p=cout_p,
        compute_dtype=cd, tanh_dtype=td)

    # Grid-invariant operands never change block index -> single-buffer them
    # when supported (no second pipeline copy of the fused weights in VMEM).
    extra = {"pipeline_mode": pl.Buffered(1)} if _HAS_BUFFERED else {}
    in_specs = [
        pl.BlockSpec((tm, Cin), lambda i: (i, 0)),                    # x row tile
        pl.BlockSpec((Cin, P * cout_p), lambda i: (0, 0), **extra),   # fused W
        pl.BlockSpec((1, P * cout_p), lambda i: (0, 0), **extra),     # fused bias
        pl.BlockSpec((P, 1, cout_p), lambda i: (0, 0, 0), **extra),   # root coeffs
    ]

    return pl.pallas_call(
        kernel,
        out_shape=jax.ShapeDtypeStruct((M, Cout), out_dtype),
        grid_spec=pltpu.PrefetchScalarGridSpec(
            num_scalar_prefetch=0,
            grid=(grid_m,),
            in_specs=in_specs,
            out_specs=pl.BlockSpec((tm, Cout), lambda i: (i, 0)),
        ),
        compiler_params=pltpu.CompilerParams(
            dimension_semantics=("parallel",),
            vmem_limit_bytes=vmem_limit),
    )(x2d, w_fused, b_fused, r3)


def power_series_conv_ref(x2d, weights, biases, root):
    """Pure-JAX reference mirroring the PyTorch forward (unfolded params)."""
    P = weights.shape[0]
    acc = None
    for p in range(P):
        y = x2d @ weights[p] + biases[p]
        if p == 0:
            acc = root[p] * y
        else:
            acc = acc + root[p] * jnp.tanh(y ** p)
    return acc


if __name__ == "__main__":
    # Small shapes consistent with the module (Linear over the last dim).
    B, N = 2, 16
    in_channel, out_channel, num_powers = 32, 32, 3

    key = jax.random.PRNGKey(0)
    kx, kw, kb, kr = jax.random.split(key, 4)

    x = jax.random.normal(kx, (B, N, in_channel), dtype=jnp.float32)

    # Deterministic parameter init (mirrors Linear's uniform(-1/sqrt(fan_in), ..)
    # and torch_geometric's uniform(size=num_powers) for root_param).
    w_bound = 1.0 / jnp.sqrt(jnp.float32(in_channel))
    weights = jax.random.uniform(
        kw, (num_powers, in_channel, out_channel),
        minval=-w_bound, maxval=w_bound, dtype=jnp.float32)
    biases = jax.random.uniform(
        kb, (num_powers, out_channel),
        minval=-w_bound, maxval=w_bound, dtype=jnp.float32)
    r_bound = 1.0 / jnp.sqrt(jnp.float32(num_powers))
    root = jax.random.uniform(
        kr, (num_powers, out_channel),
        minval=-r_bound, maxval=r_bound, dtype=jnp.float32)

    x2d = x.reshape(B * N, in_channel)
    ref = power_series_conv_ref(x2d, weights, biases, root).reshape(B, N, out_channel)

    # Fold root[0] into W0/b0 once at parameter-construction time.
    w_f, b_f, r_f = fold_root0(weights, biases, root)

    # f32 MXU-input path: tight check vs the reference.
    out_f32 = power_series_conv(
        x2d, w_f, b_f, r_f, compute_dtype=jnp.float32)
    out_f32 = out_f32.reshape(B, N, out_channel)
    jax.block_until_ready(out_f32)
    assert jnp.allclose(out_f32, ref, atol=1e-5, rtol=1e-5), "f32 mismatch vs reference"

    # bf16 MXU-input path (fast path on all generations; f32 accumulation).
    out_bf16 = power_series_conv(
        x2d, w_f, b_f, r_f, compute_dtype=jnp.bfloat16)
    out_bf16 = out_bf16.reshape(B, N, out_channel)
    jax.block_until_ready(out_bf16)
    assert jnp.allclose(out_bf16, ref, atol=5e-2, rtol=5e-2), "bf16 mismatch vs reference"

    print("KERNEL_OK")
</pallas_src>

<mosaic_0001>
module attributes {stable_mosaic.version = 11 : i64} {
  func.func @power_series_kernel(%arg0: i32, %arg1: memref<16x32xf32, #tpu.memory_space<vmem>>, %arg2: memref<32x384xf32, #tpu.memory_space<vmem>>, %arg3: memref<1x384xf32, #tpu.memory_space<vmem>>, %arg4: memref<3x1x128xf32, #tpu.memory_space<vmem>>, %arg5: memref<16x32xf32, #tpu.memory_space<vmem>>) attributes {dimension_semantics = [#tpu.dimension_semantics<parallel>], iteration_bounds = array<i64: 2>, scalar_prefetch = 0 : i64, scratch_operands = 0 : i64, tpu.core_type = #tpu.core_type<tc>, window_params = [{transform_indices = @transform_0, window_bounds = array<i64: 16, 32>}, {pipeline_mode = #tpu.pipeline_mode<synchronous>, transform_indices = @transform_1, window_bounds = array<i64: 32, 384>}, {pipeline_mode = #tpu.pipeline_mode<synchronous>, transform_indices = @transform_2, window_bounds = array<i64: 1, 384>}, {pipeline_mode = #tpu.pipeline_mode<synchronous>, transform_indices = @transform_3, window_bounds = array<i64: 3, 1, 128>}, {transform_indices = @transform_4, window_bounds = array<i64: 16, 32>}]} {
    %c0 = arith.constant 0 : index
    %c0_0 = arith.constant 0 : index
    %0 = vector.load %arg1[%c0, %c0_0] : memref<16x32xf32, #tpu.memory_space<vmem>>, vector<16x32xf32>
    %c0_1 = arith.constant 0 : index
    %c0_2 = arith.constant 0 : index
    %1 = vector.load %arg2[%c0_1, %c0_2] : memref<32x384xf32, #tpu.memory_space<vmem>>, vector<32x384xf32>
    %cst = arith.constant dense<0.000000e+00> : vector<16x384xf32>
    %2 = tpu.matmul %0, %1, %cst {dimension_numbers = #tpu.dot_dimension_numbers<[1], [0], [0], [1], [0, 0, 1, 1], [], []>} : vector<16x32xf32>, vector<32x384xf32>, vector<16x384xf32> -> vector<16x384xf32>
    %c0_3 = arith.constant 0 : index
    %c0_4 = arith.constant 0 : index
    %3 = vector.load %arg3[%c0_3, %c0_4] : memref<1x384xf32, #tpu.memory_space<vmem>>, vector<1x384xf32>
    %4 = vector.broadcast %3 : vector<1x384xf32> to vector<16x384xf32>
    %5 = arith.addf %2, %4 : vector<16x384xf32>
    %6 = vector.extract_strided_slice %5 {offsets = [0, 0], sizes = [16, 128], strides = [1, 1]} : vector<16x384xf32> to vector<16x128xf32>
    %7 = vector.extract_strided_slice %5 {offsets = [0, 128], sizes = [16, 128], strides = [1, 1]} : vector<16x384xf32> to vector<16x128xf32>
    %8 = math.tanh %7 : vector<16x128xf32>
    %c1 = arith.constant 1 : index
    %c0_5 = arith.constant 0 : index
    %c0_6 = arith.constant 0 : index
    %9 = vector.load %arg4[%c1, %c0_5, %c0_6] : memref<3x1x128xf32, #tpu.memory_space<vmem>>, vector<1x1x128xf32>
    %10 = vector.shape_cast %9 : vector<1x1x128xf32> to vector<1x128xf32>
    %11 = vector.broadcast %10 : vector<1x128xf32> to vector<16x128xf32>
    %12 = arith.mulf %11, %8 : vector<16x128xf32>
    %13 = arith.addf %6, %12 : vector<16x128xf32>
    %14 = vector.extract_strided_slice %5 {offsets = [0, 256], sizes = [16, 128], strides = [1, 1]} : vector<16x384xf32> to vector<16x128xf32>
    %15 = arith.mulf %14, %14 : vector<16x128xf32>
    %16 = math.tanh %15 : vector<16x128xf32>
    %c2 = arith.constant 2 : index
    %c0_7 = arith.constant 0 : index
    %c0_8 = arith.constant 0 : index
    %17 = vector.load %arg4[%c2, %c0_7, %c0_8] : memref<3x1x128xf32, #tpu.memory_space<vmem>>, vector<1x1x128xf32>
    %18 = vector.shape_cast %17 : vector<1x1x128xf32> to vector<1x128xf32>
    %19 = vector.broadcast %18 : vector<1x128xf32> to vector<16x128xf32>
    %20 = arith.mulf %19, %16 : vector<16x128xf32>
    %21 = arith.addf %13, %20 : vector<16x128xf32>
    %22 = vector.extract_strided_slice %21 {offsets = [0, 0], sizes = [16, 32], strides = [1, 1]} : vector<16x128xf32> to vector<16x32xf32>
    %c0_9 = arith.constant 0 : index
    %c0_10 = arith.constant 0 : index
    %23 = vector.load %arg5[%c0_9, %c0_10] : memref<16x32xf32, #tpu.memory_space<vmem>>, vector<16x32xf32>
    tpu.vector_store %arg5[%c0_9, %c0_10], %22 {strides = array<i32>} : memref<16x32xf32, #tpu.memory_space<vmem>>, vector<16x32xf32>,
    return
  }
  func.func @transform_0(%arg0: i32) -> (i32, i32) {
    %c0_i32 = arith.constant 0 : i32
    %c0_i32_0 = arith.constant 0 : i32
    return %arg0, %c0_i32 : i32, i32
  }
  func.func @transform_1(%arg0: i32) -> (i32, i32) {
    %c0_i32 = arith.constant 0 : i32
    %c0_i32_0 = arith.constant 0 : i32
    %c0_i32_1 = arith.constant 0 : i32
    return %c0_i32, %c0_i32_0 : i32, i32
  }
  func.func @transform_2(%arg0: i32) -> (i32, i32) {
    %c0_i32 = arith.constant 0 : i32
    %c0_i32_0 = arith.constant 0 : i32
    %c0_i32_1 = arith.constant 0 : i32
    return %c0_i32, %c0_i32_0 : i32, i32
  }
  func.func @transform_3(%arg0: i32) -> (i32, i32, i32) {
    %c0_i32 = arith.constant 0 : i32
    %c0_i32_0 = arith.constant 0 : i32
    %c0_i32_1 = arith.constant 0 : i32
    %c0_i32_2 = arith.constant 0 : i32
    return %c0_i32, %c0_i32_0, %c0_i32_1 : i32, i32, i32
  }
  func.func @transform_4(%arg0: i32) -> (i32, i32) {
    %c0_i32 = arith.constant 0 : i32
    %c0_i32_0 = arith.constant 0 : i32
    return %arg0, %c0_i32 : i32, i32
  }
}

</mosaic_0001>

<llo_original>
// kernel: tpu_custom_call.1
$region0: #{tpu_custom_call.1}
  #allocation0 [shape = 'u32[]', space=smem, size = 0x4, offset = 0x4, fixed_abs, tag = 'smem constant byte address 0x4 - core index']
  #allocation1 [shape = 'u32[72,128]{1,0:T(1,128)}', space=vmem, size = 0x9000, scoped, tag = 'internal scratch']
  %s0 = inlined_call_operand.hbm [shape: f32[32,32], index: 0, kind: input, shape index: {}]
  %s1 = inlined_call_operand.hbm [shape: f32[32,384], index: 1, kind: input, shape index: {}]
  %s2 = inlined_call_operand.hbm [shape: f32[1,384], index: 2, kind: input, shape index: {}]
  %s3 = inlined_call_operand.hbm [shape: f32[3,1,128], index: 3, kind: input, shape index: {}]
  %s4 = inlined_call_operand.hbm [shape: f32[32,32], index: 4, kind: output, shape index: {}]
  %s5 = sld [smem:[#allocation0]]
  $region65: #{tpu_custom_call.1} parent=0
    _
  %s7 = ssub.s32 1, %s5
  %s8 = scalar_select 0, %s7, %s5
  $region1: #{tpu_custom_call.1} parent=0
    #allocation2 [shape = 'u8[16384]{0}', space=vmem, size = 0x4000, scoped, tag = 'input window, operand 0']
    #allocation3 [shape = 's32[2]{0}', space=sflag, size = 0x8, scoped, tag = 'scoped memory for tpu_custom_call.1']
    #allocation4 [shape = 's32[2]{0}', space=sflag, size = 0x8, scoped, tag = 'scoped memory for tpu_custom_call.1']
    #allocation5 [shape = 'u8[49152]{0}', space=vmem, size = 0xc000, scoped, tag = 'input window, operand 1, single buffered']
    #allocation6 [shape = 's32[1]{0}', space=sflag, size = 0x4, scoped, tag = 'scoped memory for tpu_custom_call.1']
    #allocation7 [shape = 'u8[1536]{0}', space=vmem, size = 0x800, scoped, tag = 'input window, operand 2, single buffered']
    #allocation8 [shape = 'u8[1536]{0}', space=vmem, size = 0x800, scoped, tag = 'input window, operand 3, single buffered']
    #allocation9 [shape = 's32[1]{0}', space=sflag, size = 0x4, scoped, tag = 'scoped memory for tpu_custom_call.1']
    #allocation10 [shape = 'u8[16384]{0}', space=vmem, size = 0x4000, scoped, tag = 'output window, operand 0']
    %9 = vsyncpa [#allocation3], 0
    %s10 = scalar_lea.sflag [#allocation3], 1
    %11 = vsyncpa %s10, 0
    %12 = vsyncpa [#allocation6], 0
    %13 = vsyncpa [#allocation9], 0
    %14 = vsyncpa [#allocation4], 0
    %s15 = scalar_lea.sflag [#allocation4], 1
    %16 = vsyncpa %s15, 0
    loop: start=0, step=1, limit=4
    $region2: #{tpu_custom_call.1} parent=1 // loop_pre_header
      _
    $region3: #{tpu_custom_call.1} parent=1 // loop_header
      %s18 = sphi 0, %s22
      %p19 = scmp.ge.s32.totalorder %s18, 4
      %s28 = sphi 0, %s30
      %s31 = sphi 0, %s28
      %s32 = sphi 0, %s31
      %s48 = sphi 0, %s32
      %s52 = sphi 0, %s52
      %s54 = sphi 0, %s52
      %s55 = sphi 0, %s54
      %s69 = sphi 0, %s55
      %s73 = sphi 0, %s73
      %s75 = sphi 0, %s73
      %s76 = sphi 0, %s75
      %s90 = sphi 0, %s76
      %s94 = sphi 0, %s94
      %s96 = sphi 0, %s94
      %s97 = sphi 0, %s96
      %s111 = sphi 0, %s97
      %s117 = sphi 0, %s119
      %s120 = sphi 0, %s117
      %s121 = sphi 0, %s120
      %s137 = sphi 0, %s121
    $region4: #{tpu_custom_call.1} parent=1 // loop_header_branch
      %21 = sbr.rel (%p19) target = $region8
    $region5: #{tpu_custom_call.1} parent=1 // loop_body
      %s23 = ssub.s32 %s18, 1
      %s24 = ssub.s32 %s18, 2
      %s25 = sadd.s32 %s18, 1
      %s26 = ssub.s32 %s18, %s25
      %p27 = scmp.eq.s32.totalorder %s26, 0
      %s29 = sadd.s32 %s28, 1
      %s30 = scalar_select %p27, %s28, %s29
      %p33 = pneg %p27
      %p34 = scmp.eq.s32.totalorder %s18, 1
      %p35 = por %p33, %p34
      %p36 = scmp.ne.s32.totalorder %s28, %s31
      %p37 = scmp.eq.s32.totalorder %s18, 0
      %p38 = por %p36, %p37
      %p39 = scmp.ne.s32.totalorder %s28, %s31
      %p40 = scmp.eq.s32.totalorder %s23, 1
      %p41 = por %p39, %p40
      %p42 = scmp.ne.s32.totalorder %s31, %s32
      %p43 = scmp.eq.s32.totalorder %s23, 0
      %p44 = por %p42, %p43
      %p45 = scmp.ne.s32.totalorder %s31, %s32
      %p46 = scmp.eq.s32.totalorder %s24, 1
      %p47 = por %p45, %p46
      %p49 = scmp.ne.s32.totalorder %s32, %s48
      %p50 = scmp.eq.s32.totalorder %s24, 0
      %p51 = por %p49, %p50
      %s53 = sadd.s32 %s52, 1
      %p56 = scmp.eq.s32.totalorder %s18, 1
      %p57 = scmp.ne.s32.totalorder %s52, %s54
      %p58 = scmp.eq.s32.totalorder %s18, 0
      %p59 = por %p57, %p58
      %p60 = scmp.ne.s32.totalorder %s52, %s54
      %p61 = scmp.eq.s32.totalorder %s23, 1
      %p62 = por %p60, %p61
      %p63 = scmp.ne.s32.totalorder %s54, %s55
      %p64 = scmp.eq.s32.totalorder %s23, 0
      %p65 = por %p63, %p64
      %p66 = scmp.ne.s32.totalorder %s54, %s55
      %p67 = scmp.eq.s32.totalorder %s24, 1
      %p68 = por %p66, %p67
      %p70 = scmp.ne.s32.totalorder %s55, %s69
      %p71 = scmp.eq.s32.totalorder %s24, 0
      %p72 = por %p70, %p71
      %s74 = sadd.s32 %s73, 1
      %p77 = scmp.eq.s32.totalorder %s18, 1
      %p78 = scmp.ne.s32.totalorder %s73, %s75
      %p79 = scmp.eq.s32.totalorder %s18, 0
      %p80 = por %p78, %p79
      %p81 = scmp.ne.s32.totalorder %s73, %s75
      %p82 = scmp.eq.s32.totalorder %s23, 1
      %p83 = por %p81, %p82
      %p84 = scmp.ne.s32.totalorder %s75, %s76
      %p85 = scmp.eq.s32.totalorder %s23, 0
      %p86 = por %p84, %p85
      %p87 = scmp.ne.s32.totalorder %s75, %s76
      %p88 = scmp.eq.s32.totalorder %s24, 1
      %p89 = por %p87, %p88
      %p91 = scmp.ne.s32.totalorder %s76, %s90
      %p92 = scmp.eq.s32.totalorder %s24, 0
      %p93 = por %p91, %p92
      %s95 = sadd.s32 %s94, 1
      %p98 = scmp.eq.s32.totalorder %s18, 1
      %p99 = scmp.ne.s32.totalorder %s94, %s96
      %p100 = scmp.eq.s32.totalorder %s18, 0
      %p101 = por %p99, %p100
      %p102 = scmp.ne.s32.totalorder %s94, %s96
      %p103 = scmp.eq.s32.totalorder %s23, 1
      %p104 = por %p102, %p103
      %p105 = scmp.ne.s32.totalorder %s96, %s97
      %p106 = scmp.eq.s32.totalorder %s23, 0
      %p107 = por %p105, %p106
      %p108 = scmp.ne.s32.totalorder %s96, %s97
      %p109 = scmp.eq.s32.totalorder %s24, 1
      %p110 = por %p108, %p109
      %p112 = scmp.ne.s32.totalorder %s97, %s111
      %p113 = scmp.eq.s32.totalorder %s24, 0
      %p114 = por %p112, %p113
      %s115 = ssub.s32 %s18, %s25
      %p116 = scmp.eq.s32.totalorder %s115, 0
      %s118 = sadd.s32 %s117, 1
      %s119 = scalar_select %p116, %s117, %s118
      %p122 = pneg %p116
      %p123 = scmp.eq.s32.totalorder %s18, 1
      %p124 = por %p122, %p123
      %p125 = scmp.ne.s32.totalorder %s117, %s120
      %p126 = scmp.eq.s32.totalorder %s18, 0
      %p127 = por %p125, %p126
      %p128 = scmp.ne.s32.totalorder %s117, %s120
      %p129 = scmp.eq.s32.totalorder %s23, 1
      %p130 = por %p128, %p129
      %p131 = scmp.ne.s32.totalorder %s120, %s121
      %p132 = scmp.eq.s32.totalorder %s23, 0
      %p133 = por %p131, %p132
      %p134 = scmp.ne.s32.totalorder %s120, %s121
      %p135 = scmp.eq.s32.totalorder %s24, 1
      %p136 = por %p134, %p135
      %p138 = scmp.ne.s32.totalorder %s121, %s137
      %p139 = scmp.eq.s32.totalorder %s24, 0
      %p140 = por %p138, %p139
      %p141 = scmp.le.s32.totalorder 1, %s18
      %p142 = scmp.lt.s32.totalorder %s18, 3
      %p143 = pnand %p141, %p142
      %p144 = pneg %p143
      // Predicated region
      $region9: #{tpu_custom_call.1} parent=5 // pred_check
        _
      $region10: #{tpu_custom_call.1} parent=5 // pred_check_branch
        %146 = sbr.rel (%p143) target = $region12
      $region11: #{tpu_custom_call.1} parent=5 // pred_region
        %s147 = ssub.s32 %s18, 1
        // Predicated region
        $region13: #{tpu_custom_call.1} parent=11 // pred_check
          %p148 = pneg %p65
        $region14: #{tpu_custom_call.1} parent=11 // pred_check_branch
          %150 = sbr.rel (%p148) target = $region16
        $region15: #{tpu_custom_call.1} parent=11 // pred_region
          %152 = vsyncadd [#allocation6], 0
          %s153 = sshll.u32 %s1, 4
          %s154 = int_to_ptr.hbm [resolvable:$true] %s153
          %s155 = sshll.u32 [#allocation5], 4
          %s156 = int_to_ptr.vmem [resolvable:$true] %s155
          %161 = dma.hbm_to_vmem [thread:$0]  %s154, 1536, %s156, [#allocation6], 384, 384, 24
        $region16: #{tpu_custom_call.1} parent=11 // pred_fallthru
          _
        // Predicated region
        $region17: #{tpu_custom_call.1} parent=11 // pred_check
          %p162 = pneg %p86
        $region18: #{tpu_custom_call.1} parent=11 // pred_check_branch
          %164 = sbr.rel (%p162) target = $region20
        $region19: #{tpu_custom_call.1} parent=11 // pred_region
          %166 = vsyncadd [#allocation6], 0
          %s168 = sshll.u32 %s2, 4
          %s169 = int_to_ptr.hbm [resolvable:$true] %s168
          %s170 = sshll.u32 [#allocation7], 4
          %s171 = int_to_ptr.vmem [resolvable:$true] %s170
          %173 = dma.hbm_to_vmem [thread:$0]  %s169, 48, %s171, [#allocation6]
        $region20: #{tpu_custom_call.1} parent=11 // pred_fallthru
          _
        // Predicated region
        $region21: #{tpu_custom_call.1} parent=11 // pred_check
          %p174 = pneg %p107
        $region22: #{tpu_custom_call.1} parent=11 // pred_check_branch
          %176 = sbr.rel (%p174) target = $region24
        $region23: #{tpu_custom_call.1} parent=11 // pred_region
          %178 = vsyncadd [#allocation9], 0
          %s179 = sshll.u32 %s3, 4
          %s180 = int_to_ptr.hbm [resolvable:$true] %s179
          %s181 = sshll.u32 [#allocation8], 4
          %s182 = int_to_ptr.vmem [resolvable:$true] %s181
          %187 = dma.hbm_to_vmem [thread:$0]  %s180, 48, %s182, [#allocation9], 16, 16, 1
        $region24: #{tpu_custom_call.1} parent=11 // pred_fallthru
          _
      $region12: #{tpu_custom_call.1} parent=5 // pred_fallthru
        _
      %p188 = scmp.lt.s32.totalorder %s18, 2
      // Predicated region
      $region25: #{tpu_custom_call.1} parent=5 // pred_check
        %p189 = pneg %p188
      $region26: #{tpu_custom_call.1} parent=5 // pred_check_branch
        %191 = sbr.rel (%p189) target = $region28
      $region27: #{tpu_custom_call.1} parent=5 // pred_region
        // Predicated region
        $region29: #{tpu_custom_call.1} parent=27 // pred_check
          %p192 = pneg %p38
        $region30: #{tpu_custom_call.1} parent=27 // pred_check_branch
          %194 = sbr.rel (%p192) target = $region32
        $region31: #{tpu_custom_call.1} parent=27 // pred_region
          %s195 = sand.u32 %s28, 1
          %s196 = scalar_lea.sflag [#allocation3], %s195
          %s197 = sand.u32 %s28, 1
          %s198 = smul.addr %s197, 16
          %s199 = scalar_lea.vmem [#allocation2], %s198
          %s200 = smul.u32 2, %s18
          %202 = vsyncadd %s196, 0
          %s203 = smul.addr %s200, 8
          %s204 = scalar_lea.hbm %s0, %s203
          %s205 = sshll.u32 %s204, 4
          %s206 = int_to_ptr.hbm [resolvable:$true] %s205
          %s207 = sshll.u32 %s199, 4
          %s208 = int_to_ptr.vmem [resolvable:$true] %s207
          %213 = dma.hbm_to_vmem [thread:$0]  %s206, 256, %s208, %s196, 128, 128, 8
        $region32: #{tpu_custom_call.1} parent=27 // pred_fallthru
          _
      $region28: #{tpu_custom_call.1} parent=5 // pred_fallthru
        _
      %p214 = scmp.le.s32.totalorder 1, %s18
      %p215 = scmp.lt.s32.totalorder %s18, 3
      %p216 = pnand %p214, %p215
      %p217 = pneg %p216
      // Predicated region
      $region33: #{tpu_custom_call.1} parent=5 // pred_check
        _
      $region34: #{tpu_custom_call.1} parent=5 // pred_check_branch
        %219 = sbr.rel (%p216) target = $region36
      $region35: #{tpu_custom_call.1} parent=5 // pred_region
        %s220 = ssub.s32 %s18, 1
        %s221 = sand.u32 %s31, 1
        %s222 = scalar_lea.sflag [#allocation3], %s221
        %s223 = sand.u32 %s31, 1
        %s224 = smul.addr %s223, 16
        %s225 = scalar_lea.vmem [#allocation2], %s224
        // Predicated region
        $region37: #{tpu_custom_call.1} parent=35 // pred_check
          %p226 = pneg %p44
        $region38: #{tpu_custom_call.1} parent=35 // pred_check_branch
          %228 = sbr.rel (%p226) target = $region40
        $region39: #{tpu_custom_call.1} parent=35 // pred_region
          %230 = dma.done %s222, 256
        $region40: #{tpu_custom_call.1} parent=35 // pred_fallthru
          _
        // Predicated region
        $region41: #{tpu_custom_call.1} parent=35 // pred_check
          %p231 = pneg %p65
        $region42: #{tpu_custom_call.1} parent=35 // pred_check_branch
          %233 = sbr.rel (%p231) target = $region44
        $region43: #{tpu_custom_call.1} parent=35 // pred_region
          %235 = dma.done [#allocation6], 1536
        $region44: #{tpu_custom_call.1} parent=35 // pred_fallthru
          _
        // Predicated region
        $region45: #{tpu_custom_call.1} parent=35 // pred_check
          %p236 = pneg %p86
        $region46: #{tpu_custom_call.1} parent=35 // pred_check_branch
          %238 = sbr.rel (%p236) target = $region48
        $region47: #{tpu_custom_call.1} parent=35 // pred_region
          %240 = dma.done [#allocation6], 48
        $region48: #{tpu_custom_call.1} parent=35 // pred_fallthru
          _
        // Predicated region
        $region49: #{tpu_custom_call.1} parent=35 // pred_check
          %p241 = pneg %p107
        $region50: #{tpu_custom_call.1} parent=35 // pred_check_branch
          %243 = sbr.rel (%p241) target = $region52
        $region51: #{tpu_custom_call.1} parent=35 // pred_region
          %245 = dma.done [#allocation9], 48
        $region52: #{tpu_custom_call.1} parent=35 // pred_fallthru
          _
        %s246 = sand.u32 %s31, 1
        %s247 = scalar_lea.sflag [#allocation3], %s246
        %s248 = sand.u32 %s31, 1
        %s249 = smul.addr %s248, 16
        %s250 = scalar_lea.vmem [#allocation2], %s249
        %p251 = pneg %p44
        %p252 = pneg %p41
        %p253 = pneg %p65
        %p254 = pneg %p62
        %p255 = pneg %p86
        %p256 = pneg %p83
        %p257 = pneg %p107
        %p258 = pneg %p104
        %p259 = pneg %p133
        %p260 = pneg %p130
        %s261 = sand.u32 %s120, 1
        %s262 = scalar_lea.sflag [#allocation4], %s261
        %s263 = sand.u32 %s120, 1
        %s264 = smul.addr %s263, 16
        %s265 = scalar_lea.vmem [#allocation10], %s264
        %s266 = smul.u32 2, %s23
        %s267 = smul.u32 2, %s23
        %v268 = vld [vmem:[%s225] sm:$0xff]
        %v269 = vld [vmem:[%s225 + $0x8] sm:$0xff]
        %v270 = vld [vmem:[#allocation5] sm:$0xff]
        %v271 = vld [vmem:[#allocation5 + $0x8] sm:$0xff]
        %v272 = vld [vmem:[#allocation5 + $0x10] sm:$0xff]
        %v273 = vld [vmem:[#allocation5 + $0x18] sm:$0xff]
        %v274 = vld [vmem:[#allocation5 + $0x20] sm:$0xff]
        %v275 = vld [vmem:[#allocation5 + $0x28] sm:$0xff]
        %v276 = vld [vmem:[#allocation5 + $0x30] sm:$0xff]
        %v277 = vld [vmem:[#allocation5 + $0x38] sm:$0xff]
        %v278 = vld [vmem:[#allocation5 + $0x40] sm:$0xff]
        %v279 = vld [vmem:[#allocation5 + $0x48] sm:$0xff]
        %v280 = vld [vmem:[#allocation5 + $0x50] sm:$0xff]
        %v281 = vld [vmem:[#allocation5 + $0x58] sm:$0xff]
        %v282 = vld [vmem:[#allocation7] sm:$0x7]
        %v284 = vperm.slane %v282, 0
        %v285 = vperm.slane %v282, 1
        %v286 = vperm.slane %v282, 2
        %vm290 = vcmask 261120
        %v292 = vsel %vm290, %v268, 0
        %v295 = vsel %vm290, %v269, 0
        %297 = vmatpush.msra.mxu0 0.0
        %298 = vmatpush.msra.mxu0 0.0
        %299 = vmatpush.msra.mxu0 0.0
        %300 = vmatpush.msra.mxu0 0.0
        %301 = vmatpush.msra.mxu0 0.0
        %302 = vmatpush.msra.mxu0 0.0
        %303 = vmatpush.msra.mxu0 0.0
        %304 = vmatpush.msra.mxu0 0.0
        %305 = vmatpush.msra.mxu0 0.0
        %306 = vmatpush.msra.mxu0 0.0
        %307 = vmatpush.msra.mxu0 0.0
        %308 = vmatpush.msra.mxu0 0.0
        %309 = vmatpush.msra.mxu0 %v279
        %310 = vmatpush.msra.mxu0 %v276
        %311 = vmatpush.msra.mxu0 %v273
        %312 = vmatpush.msra.mxu0 %v270
        %313 = vmatmul.f32.gmra.mxu0 %v292
        %v314 = vpop.f32.mrf.mxu0
        %v315 = vadd.f32 %v284, %v314
        %316 = vmatmul.f32.gmra.mxu0 %v295
        %v317 = vpop.f32.mrf.mxu0
        %v318 = vadd.f32 %v284, %v317
        %319 = vdwg.mxu0
        %320 = vmatpush.msra.mxu0 0.0
        %321 = vmatpush.msra.mxu0 0.0
        %322 = vmatpush.msra.mxu0 0.0
        %323 = vmatpush.msra.mxu0 0.0
        %324 = vmatpush.msra.mxu0 0.0
        %325 = vmatpush.msra.mxu0 0.0
        %326 = vmatpush.msra.mxu0 0.0
        %327 = vmatpush.msra.mxu0 0.0
        %328 = vmatpush.msra.mxu0 0.0
        %329 = vmatpush.msra.mxu0 0.0
        %330 = vmatpush.msra.mxu0 0.0
        %331 = vmatpush.msra.mxu0 0.0
        %332 = vmatpush.msra.mxu0 %v280
        %333 = vmatpush.msra.mxu0 %v277
        %334 = vmatpush.msra.mxu0 %v274
        %335 = vmatpush.msra.mxu0 %v271
        %336 = vmatmul.f32.gmra.mxu0 %v292
        %v337 = vpop.f32.mrf.mxu0
        %v338 = vadd.f32 %v285, %v337
        %339 = vmatmul.f32.gmra.mxu0 %v295
        %v340 = vpop.f32.mrf.mxu0
        %v341 = vadd.f32 %v285, %v340
        %342 = vdwg.mxu0
        %343 = vmatpush.msra.mxu0 0.0
        %344 = vmatpush.msra.mxu0 0.0
        %345 = vmatpush.msra.mxu0 0.0
        %346 = vmatpush.msra.mxu0 0.0
        %347 = vmatpush.msra.mxu0 0.0
        %348 = vmatpush.msra.mxu0 0.0
        %349 = vmatpush.msra.mxu0 0.0
        %350 = vmatpush.msra.mxu0 0.0
        %351 = vmatpush.msra.mxu0 0.0
        %352 = vmatpush.msra.mxu0 0.0
        %353 = vmatpush.msra.mxu0 0.0
        %354 = vmatpush.msra.mxu0 0.0
        %355 = vmatpush.msra.mxu0 %v281
        %356 = vmatpush.msra.mxu0 %v278
        %357 = vmatpush.msra.mxu0 %v275
        %358 = vmatpush.msra.mxu0 %v272
        %359 = vmatmul.f32.gmra.mxu0 %v292
        %v360 = vpop.f32.mrf.mxu0
        %v361 = vadd.f32 %v286, %v360
        %362 = vmatmul.f32.gmra.mxu0 %v295
        %v363 = vpop.f32.mrf.mxu0
        %v364 = vadd.f32 %v286, %v363
        %365 = vdwg.mxu0
        %v366 = vtanh.pop %v338
        %v367 = vtanh.pop %v341
        %s368 = scalar_lea.vmem [#allocation8], 1
        %v369 = vld [vmem:[%s368] sm:$0x1]
        %v371 = vperm.slane %v369, 0
        %v373 = vmul.f32 %v371, %v366
        %v374 = vmul.f32 %v371, %v367
        %v375 = vadd.f32 %v315, %v373
        %v376 = vadd.f32 %v318, %v374
        %v377 = vmul.f32 %v361, %v361
        %v378 = vmul.f32 %v364, %v364
        %v379 = vtanh.pop %v377
        %v380 = vtanh.pop %v378
        %s381 = scalar_lea.vmem [#allocation8], 2
        %v382 = vld [vmem:[%s381] sm:$0x1]
        %v384 = vperm.slane %v382, 0
        %v386 = vmul.f32 %v384, %v379
        %v387 = vmul.f32 %v384, %v380
        %v388 = vadd.f32 %v375, %v386
        %v389 = vadd.f32 %v376, %v387
        %390 = vst.msk [vmem:[%s265] sm:$0xff] %vm290, %v388
        %391 = vst.msk [vmem:[%s265 + $0x8] sm:$0xff] %vm290, %v389
        %s392 = sand.u32 %s120, 1
        %s393 = scalar_lea.sflag [#allocation4], %s392
        %s394 = sand.u32 %s120, 1
        %s395 = smul.addr %s394, 16
        %s396 = scalar_lea.vmem [#allocation10], %s395
        // Predicated region
        $region53: #{tpu_custom_call.1} parent=35 // pred_check
          %p397 = pneg %p130
        $region54: #{tpu_custom_call.1} parent=35 // pred_check_branch
          %399 = sbr.rel (%p397) target = $region56
        $region55: #{tpu_custom_call.1} parent=35 // pred_region
          %s400 = smul.u32 2, %s23
          %402 = vsyncadd %s393, 0
          %s403 = smul.addr %s400, 8
          %s404 = scalar_lea.hbm %s4, %s403
          %s405 = sshll.u32 %s396, 4
          %s406 = int_to_ptr.vmem [resolvable:$true] %s405
          %s407 = sshll.u32 %s404, 4
          %s408 = int_to_ptr.hbm [resolvable:$true] %s407
          %413 = dma.vmem_to_hbm [thread:$0]  %s406, 256, %s408, %s393, 128, 128, 8
        $region56: #{tpu_custom_call.1} parent=35 // pred_fallthru
          _
      $region36: #{tpu_custom_call.1} parent=5 // pred_fallthru
        _
      %p414 = scmp.le.s32.totalorder 2, %s18
      // Predicated region
      $region57: #{tpu_custom_call.1} parent=5 // pred_check
        %p415 = pneg %p414
      $region58: #{tpu_custom_call.1} parent=5 // pred_check_branch
        %417 = sbr.rel (%p415) target = $region60
      $region59: #{tpu_custom_call.1} parent=5 // pred_region
        %s418 = ssub.s32 %s18, 2
        // Predicated region
        $region61: #{tpu_custom_call.1} parent=59 // pred_check
          %p419 = pneg %p136
        $region62: #{tpu_custom_call.1} parent=59 // pred_check_branch
          %421 = sbr.rel (%p419) target = $region64
        $region63: #{tpu_custom_call.1} parent=59 // pred_region
          %s422 = sand.u32 %s121, 1
          %s423 = scalar_lea.sflag [#allocation4], %s422
          %s424 = sand.u32 %s121, 1
          %s425 = smul.addr %s424, 16
          %s426 = scalar_lea.vmem [#allocation10], %s425
          %428 = dma.done %s423, 256
        $region64: #{tpu_custom_call.1} parent=59 // pred_fallthru
          _
      $region60: #{tpu_custom_call.1} parent=5 // pred_fallthru
        _
    $region6: #{tpu_custom_call.1} parent=1 // loop_footer
      %s22 = sadd.s32 1, %s18
    $region7: #{tpu_custom_call.1} parent=1 // loop_footer_branch
      %17 = sbr.rel target = $region3
    $region8: #{tpu_custom_call.1} parent=1 // loop_exit
      _
    %429 = vsyncpa [#allocation3], 1
    %s430 = scalar_lea.sflag [#allocation3], 1
    %431 = vsyncpa %s430, 1
    %432 = vsyncpa [#allocation6], 1
    %433 = vsyncpa [#allocation9], 1
    %434 = vsyncpa [#allocation4], 1
    %s435 = scalar_lea.sflag [#allocation4], 1
    %436 = vsyncpa %s435, 1

</llo_original>
